<compile_context>
chip_gen: v5e
topology: v5e:2x2
jax: 0.10.0
libtpu: 0.0.40
codegen_flags: <defaults>
</compile_context>

<pallas_src>
import jax
import jax.numpy as jnp
from jax import lax
from jax.experimental import pallas as pl
from jax.experimental.pallas import tpu as pltpu

LN_EPS = 1e-5


def gcn_kernel(edges_ref, nodes_ref, w_ref, b_ref, gamma_ref, beta_ref, out_ref):
    bt = edges_ref.shape[0]          # graphs in this grid step (static)
    n = edges_ref.shape[1]           # nodes per graph (static)

    x2 = nodes_ref[...]              # (bt*N, Din) f32, flattened node features

    # --- Linear first (associativity): one big flat matmul on the MXU -------
    #   ReLU((L@X) W^T + b) == ReLU(L @ (X W^T) + b)
    y2 = jnp.dot(x2.astype(jnp.bfloat16), w_ref[...],    # w_ref = bf16 W^T
                 preferred_element_type=jnp.float32)      # (bt*N, Dout) f32

    bias = b_ref[...]                # (1, Dout) f32
    gamma = gamma_ref[...]           # (1, Dout) f32
    beta = beta_ref[...]             # (1, Dout) f32

    # --- per-graph normalized aggregation + epilogue (bt small, unrolled) ---
    for g in range(bt):
        a_g = edges_ref[g]                                # (N, N) bf16, 0/1
        y_g = y2[g * n:(g + 1) * n, :]                    # (N, Dout) f32
        x_g = x2[g * n:(g + 1) * n, :]                    # (N, Din)  f32

        # d = rsqrt(deg(A) + 1);  L @ y = d * (A @ (d*y) + d*y)
        deg = jnp.sum(a_g.astype(jnp.float32), axis=-1, keepdims=True) + 1.0
        dinv = lax.rsqrt(deg)                             # (N, 1) f32
        ys = dinv * y_g                                   # D^{-1/2} y, f32
        neigh = jnp.dot(a_g, ys.astype(jnp.bfloat16),     # MXU: bf16 in, f32 acc
                        preferred_element_type=jnp.float32)
        h = dinv * (neigh + ys)                           # == L @ (X W^T), f32

        h = jnp.maximum(h + bias, 0.0)                    # bias + ReLU
        h = h + x_g                                       # residual (Din == Dout)

        # LayerNorm over the feature dim, f32
        mean = jnp.mean(h, axis=-1, keepdims=True)
        var = jnp.mean((h - mean) ** 2, axis=-1, keepdims=True)
        h = (h - mean) * lax.rsqrt(var + LN_EPS)
        out_ref[g * n:(g + 1) * n, :] = (h * gamma + beta).astype(out_ref.dtype)


def gcn_layer(nodes, edges, w, b, gamma, beta, *, batch_tile=None):
    B, N, d_in = nodes.shape
    d_out, d_in_w = w.shape
    assert edges.shape == (B, N, N), "edges must be (B, N, N) dense adjacency"
    assert d_in_w == d_in, "W must be (out_dim, in_dim)"
    assert d_out == d_in, "residual connection requires in_dim == out_dim"

    # Whole batch per grid step by default (toy sizes); for large B pick bt so
    # that bt*N^2*2 bytes of (bf16) adjacency fits VMEM with double-buffering
    # and the grid has >=4 steps.
    bt = B if batch_tile is None else batch_tile
    assert B % bt == 0, "batch must be divisible by the batch tile"
    assert bt == B or (bt * N) % 8 == 0, "row tile must be sublane aligned"
    steps = B // bt

    nodes2 = nodes.reshape(B * N, d_in)                 # free metadata reshape
    edges_bf16 = edges.astype(jnp.bfloat16)             # 0/1 adjacency exact; halves DMA
    w_t = w.T.astype(jnp.bfloat16)                      # cast once in the wrapper
    b2 = b.reshape(1, d_out).astype(jnp.float32)
    g2 = gamma.reshape(1, d_out).astype(jnp.float32)
    be2 = beta.reshape(1, d_out).astype(jnp.float32)

    out2 = pl.pallas_call(
        gcn_kernel,
        out_shape=jax.ShapeDtypeStruct((B * N, d_out), nodes.dtype),
        grid_spec=pltpu.PrefetchScalarGridSpec(
            num_scalar_prefetch=0,
            grid=(steps,),
            in_specs=[
                pl.BlockSpec((bt, N, N), lambda i: (i, 0, 0)),     # edges (bf16)
                pl.BlockSpec((bt * N, d_in), lambda i: (i, 0)),    # nodes (flat f32)
                pl.BlockSpec((d_in, d_out), lambda i: (0, 0)),     # W^T (bf16)
                pl.BlockSpec((1, d_out), lambda i: (0, 0)),        # bias
                pl.BlockSpec((1, d_out), lambda i: (0, 0)),        # ln gamma
                pl.BlockSpec((1, d_out), lambda i: (0, 0)),        # ln beta
            ],
            out_specs=pl.BlockSpec((bt * N, d_out), lambda i: (i, 0)),
        ),
        compiler_params=pltpu.CompilerParams(
            dimension_semantics=("parallel",)),
    )(edges_bf16, nodes2, w_t, b2, g2, be2)
    return out2.reshape(B, N, d_out)


def gcn_reference(nodes, edges, w, b, gamma, beta):
    # Pure-f32 reference matching the PyTorch module semantics.
    N = edges.shape[-1]
    a = edges + jnp.eye(N, dtype=edges.dtype)
    d = jnp.power(a.sum(-1), -0.5)
    l_norm = d[..., :, None] * a * d[..., None, :]
    out = jnp.einsum("bij,bjd->bid", l_norm, nodes)
    out = jnp.maximum(out @ w.T + b, 0.0)
    out = out + nodes
    mean = out.mean(-1, keepdims=True)
    var = ((out - mean) ** 2).mean(-1, keepdims=True)
    return (out - mean) / jnp.sqrt(var + LN_EPS) * gamma + beta


if __name__ == "__main__":
    B, N, D = 2, 16, 32      # batch, nodes, hidden (in_dim == out_dim for residual)
    key = jax.random.PRNGKey(0)
    k_nodes, k_edges, k_w, k_b = jax.random.split(key, 4)

    nodes = jax.random.normal(k_nodes, (B, N, D), dtype=jnp.float32)
    # non-negative 0/1 adjacency (degrees stay positive after + I)
    edges = (jax.random.uniform(k_edges, (B, N, N)) > 0.6).astype(jnp.float32)

    # deterministic parameter init (Linear: (out_dim, in_dim); LayerNorm: gamma=1, beta=0)
    w = jax.random.normal(k_w, (D, D), dtype=jnp.float32) * (1.0 / jnp.sqrt(D))
    b = jax.random.normal(k_b, (D,), dtype=jnp.float32) * 0.01
    gamma = jnp.ones((D,), dtype=jnp.float32)
    beta = jnp.zeros((D,), dtype=jnp.float32)

    out = gcn_layer(nodes, edges, w, b, gamma, beta)
    out = jax.block_until_ready(out)

    ref = gcn_reference(nodes, edges, w, b, gamma, beta)
    assert out.shape == (B, N, D)
    assert jnp.all(jnp.isfinite(out)), "non-finite output"
    # Tolerance accounts for bf16 MXU operands (f32 accumulation / f32 LayerNorm).
    assert jnp.allclose(out, ref, atol=3e-2, rtol=3e-2), "mismatch vs reference"

    print("KERNEL_OK")
</pallas_src>

<mosaic_0001>
module attributes {stable_mosaic.version = 11 : i64} {
  func.func @gcn_kernel(%arg0: i32, %arg1: memref<2x16x16xbf16, #tpu.memory_space<vmem>>, %arg2: memref<32x32xf32, #tpu.memory_space<vmem>>, %arg3: memref<32x32xbf16, #tpu.memory_space<vmem>>, %arg4: memref<1x32xf32, #tpu.memory_space<vmem>>, %arg5: memref<1x32xf32, #tpu.memory_space<vmem>>, %arg6: memref<1x32xf32, #tpu.memory_space<vmem>>, %arg7: memref<32x32xf32, #tpu.memory_space<vmem>>) attributes {dimension_semantics = [#tpu.dimension_semantics<parallel>], iteration_bounds = array<i64: 1>, scalar_prefetch = 0 : i64, scratch_operands = 0 : i64, tpu.core_type = #tpu.core_type<tc>, window_params = [{transform_indices = @transform_0, window_bounds = array<i64: 2, 16, 16>}, {transform_indices = @transform_1, window_bounds = array<i64: 32, 32>}, {pipeline_mode = #tpu.pipeline_mode<synchronous>, transform_indices = @transform_2, window_bounds = array<i64: 32, 32>}, {pipeline_mode = #tpu.pipeline_mode<synchronous>, transform_indices = @transform_3, window_bounds = array<i64: 1, 32>}, {pipeline_mode = #tpu.pipeline_mode<synchronous>, transform_indices = @transform_4, window_bounds = array<i64: 1, 32>}, {pipeline_mode = #tpu.pipeline_mode<synchronous>, transform_indices = @transform_5, window_bounds = array<i64: 1, 32>}, {transform_indices = @transform_6, window_bounds = array<i64: 32, 32>}]} {
    %c0 = arith.constant 0 : index
    %c0_0 = arith.constant 0 : index
    %0 = vector.load %arg2[%c0, %c0_0] : memref<32x32xf32, #tpu.memory_space<vmem>>, vector<32x32xf32>
    %1 = arith.truncf %0 : vector<32x32xf32> to vector<32x32xbf16>
    %c0_1 = arith.constant 0 : index
    %c0_2 = arith.constant 0 : index
    %2 = vector.load %arg3[%c0_1, %c0_2] : memref<32x32xbf16, #tpu.memory_space<vmem>>, vector<32x32xbf16>
    %cst = arith.constant dense<0.000000e+00> : vector<32x32xf32>
    %3 = tpu.matmul %1, %2, %cst {dimension_numbers = #tpu.dot_dimension_numbers<[1], [0], [0], [1], [0, 0, 1, 1], [], []>} : vector<32x32xbf16>, vector<32x32xbf16>, vector<32x32xf32> -> vector<32x32xf32>
    %c0_3 = arith.constant 0 : index
    %c0_4 = arith.constant 0 : index
    %4 = vector.load %arg4[%c0_3, %c0_4] : memref<1x32xf32, #tpu.memory_space<vmem>>, vector<1x32xf32>
    %c0_5 = arith.constant 0 : index
    %c0_6 = arith.constant 0 : index
    %5 = vector.load %arg5[%c0_5, %c0_6] : memref<1x32xf32, #tpu.memory_space<vmem>>, vector<1x32xf32>
    %c0_7 = arith.constant 0 : index
    %c0_8 = arith.constant 0 : index
    %6 = vector.load %arg6[%c0_7, %c0_8] : memref<1x32xf32, #tpu.memory_space<vmem>>, vector<1x32xf32>
    %c0_9 = arith.constant 0 : index
    %c0_10 = arith.constant 0 : index
    %c0_11 = arith.constant 0 : index
    %7 = vector.load %arg1[%c0_9, %c0_10, %c0_11] : memref<2x16x16xbf16, #tpu.memory_space<vmem>>, vector<1x16x16xbf16>
    %8 = vector.shape_cast %7 : vector<1x16x16xbf16> to vector<16x16xbf16>
    %9 = vector.extract_strided_slice %3 {offsets = [0, 0], sizes = [16, 32], strides = [1, 1]} : vector<32x32xf32> to vector<16x32xf32>
    %10 = vector.extract_strided_slice %0 {offsets = [0, 0], sizes = [16, 32], strides = [1, 1]} : vector<32x32xf32> to vector<16x32xf32>
    %11 = arith.extf %8 : vector<16x16xbf16> to vector<16x16xf32>
    %cst_12 = arith.constant dense<0.000000e+00> : vector<16xf32>
    %12 = vector.multi_reduction <add>, %11, %cst_12 [1] : vector<16x16xf32> to vector<16xf32>
    %13 = vector.shape_cast %12 : vector<16xf32> to vector<16x1xf32>
    %cst_13 = arith.constant 1.000000e+00 : f32
    %14 = vector.broadcast %cst_13 : f32 to vector<16x1xf32>
    %15 = arith.addf %13, %14 : vector<16x1xf32>
    %16 = math.rsqrt %15 : vector<16x1xf32>
    %17 = vector.broadcast %16 : vector<16x1xf32> to vector<16x32xf32>
    %18 = arith.mulf %17, %9 : vector<16x32xf32>
    %19 = arith.truncf %18 : vector<16x32xf32> to vector<16x32xbf16>
    %cst_14 = arith.constant dense<0.000000e+00> : vector<16x32xf32>
    %20 = tpu.matmul %8, %19, %cst_14 {dimension_numbers = #tpu.dot_dimension_numbers<[1], [0], [0], [1], [0, 0, 1, 1], [], []>} : vector<16x16xbf16>, vector<16x32xbf16>, vector<16x32xf32> -> vector<16x32xf32>
    %21 = arith.addf %20, %18 : vector<16x32xf32>
    %22 = vector.broadcast %16 : vector<16x1xf32> to vector<16x32xf32>
    %23 = arith.mulf %22, %21 : vector<16x32xf32>
    %24 = vector.broadcast %4 : vector<1x32xf32> to vector<16x32xf32>
    %25 = arith.addf %23, %24 : vector<16x32xf32>
    %cst_15 = arith.constant 0.000000e+00 : f32
    %26 = vector.broadcast %cst_15 : f32 to vector<16x32xf32>
    %27 = arith.maximumf %25, %26 : vector<16x32xf32>
    %28 = arith.addf %27, %10 : vector<16x32xf32>
    %cst_16 = arith.constant dense<0.000000e+00> : vector<16xf32>
    %29 = vector.multi_reduction <add>, %28, %cst_16 [1] : vector<16x32xf32> to vector<16xf32>
    %30 = vector.shape_cast %29 : vector<16xf32> to vector<16x1xf32>
    %cst_17 = arith.constant 3.200000e+01 : f32
    %31 = vector.broadcast %cst_17 : f32 to vector<16x1xf32>
    %32 = arith.divf %30, %31 : vector<16x1xf32>
    %33 = vector.broadcast %32 : vector<16x1xf32> to vector<16x32xf32>
    %34 = arith.subf %28, %33 : vector<16x32xf32>
    %35 = arith.mulf %34, %34 : vector<16x32xf32>
    %cst_18 = arith.constant dense<0.000000e+00> : vector<16xf32>
    %36 = vector.multi_reduction <add>, %35, %cst_18 [1] : vector<16x32xf32> to vector<16xf32>
    %37 = vector.shape_cast %36 : vector<16xf32> to vector<16x1xf32>
    %cst_19 = arith.constant 3.200000e+01 : f32
    %38 = vector.broadcast %cst_19 : f32 to vector<16x1xf32>
    %39 = arith.divf %37, %38 : vector<16x1xf32>
    %40 = vector.broadcast %32 : vector<16x1xf32> to vector<16x32xf32>
    %41 = arith.subf %28, %40 : vector<16x32xf32>
    %cst_20 = arith.constant 9.99999974E-6 : f32
    %42 = vector.broadcast %cst_20 : f32 to vector<16x1xf32>
    %43 = arith.addf %39, %42 : vector<16x1xf32>
    %44 = math.rsqrt %43 : vector<16x1xf32>
    %45 = vector.broadcast %44 : vector<16x1xf32> to vector<16x32xf32>
    %46 = arith.mulf %41, %45 : vector<16x32xf32>
    %47 = vector.broadcast %5 : vector<1x32xf32> to vector<16x32xf32>
    %48 = arith.mulf %46, %47 : vector<16x32xf32>
    %49 = vector.broadcast %6 : vector<1x32xf32> to vector<16x32xf32>
    %50 = arith.addf %48, %49 : vector<16x32xf32>
    %c0_21 = arith.constant 0 : index
    %c0_22 = arith.constant 0 : index
    %51 = vector.load %arg7[%c0_21, %c0_22] : memref<32x32xf32, #tpu.memory_space<vmem>>, vector<16x32xf32>
    tpu.vector_store %arg7[%c0_21, %c0_22], %50 {strides = array<i32>} : memref<32x32xf32, #tpu.memory_space<vmem>>, vector<16x32xf32>,
    %c1 = arith.constant 1 : index
    %c0_23 = arith.constant 0 : index
    %c0_24 = arith.constant 0 : index
    %52 = vector.load %arg1[%c1, %c0_23, %c0_24] : memref<2x16x16xbf16, #tpu.memory_space<vmem>>, vector<1x16x16xbf16>
    %53 = vector.shape_cast %52 : vector<1x16x16xbf16> to vector<16x16xbf16>
    %54 = vector.extract_strided_slice %3 {offsets = [16, 0], sizes = [16, 32], strides = [1, 1]} : vector<32x32xf32> to vector<16x32xf32>
    %55 = vector.extract_strided_slice %0 {offsets = [16, 0], sizes = [16, 32], strides = [1, 1]} : vector<32x32xf32> to vector<16x32xf32>
    %56 = arith.extf %53 : vector<16x16xbf16> to vector<16x16xf32>
    %cst_25 = arith.constant dense<0.000000e+00> : vector<16xf32>
    %57 = vector.multi_reduction <add>, %56, %cst_25 [1] : vector<16x16xf32> to vector<16xf32>
    %58 = vector.shape_cast %57 : vector<16xf32> to vector<16x1xf32>
    %cst_26 = arith.constant 1.000000e+00 : f32
    %59 = vector.broadcast %cst_26 : f32 to vector<16x1xf32>
    %60 = arith.addf %58, %59 : vector<16x1xf32>
    %61 = math.rsqrt %60 : vector<16x1xf32>
    %62 = vector.broadcast %61 : vector<16x1xf32> to vector<16x32xf32>
    %63 = arith.mulf %62, %54 : vector<16x32xf32>
    %64 = arith.truncf %63 : vector<16x32xf32> to vector<16x32xbf16>
    %cst_27 = arith.constant dense<0.000000e+00> : vector<16x32xf32>
    %65 = tpu.matmul %53, %64, %cst_27 {dimension_numbers = #tpu.dot_dimension_numbers<[1], [0], [0], [1], [0, 0, 1, 1], [], []>} : vector<16x16xbf16>, vector<16x32xbf16>, vector<16x32xf32> -> vector<16x32xf32>
    %66 = arith.addf %65, %63 : vector<16x32xf32>
    %67 = vector.broadcast %61 : vector<16x1xf32> to vector<16x32xf32>
    %68 = arith.mulf %67, %66 : vector<16x32xf32>
    %69 = vector.broadcast %4 : vector<1x32xf32> to vector<16x32xf32>
    %70 = arith.addf %68, %69 : vector<16x32xf32>
    %cst_28 = arith.constant 0.000000e+00 : f32
    %71 = vector.broadcast %cst_28 : f32 to vector<16x32xf32>
    %72 = arith.maximumf %70, %71 : vector<16x32xf32>
    %73 = arith.addf %72, %55 : vector<16x32xf32>
    %cst_29 = arith.constant dense<0.000000e+00> : vector<16xf32>
    %74 = vector.multi_reduction <add>, %73, %cst_29 [1] : vector<16x32xf32> to vector<16xf32>
    %75 = vector.shape_cast %74 : vector<16xf32> to vector<16x1xf32>
    %cst_30 = arith.constant 3.200000e+01 : f32
    %76 = vector.broadcast %cst_30 : f32 to vector<16x1xf32>
    %77 = arith.divf %75, %76 : vector<16x1xf32>
    %78 = vector.broadcast %77 : vector<16x1xf32> to vector<16x32xf32>
    %79 = arith.subf %73, %78 : vector<16x32xf32>
    %80 = arith.mulf %79, %79 : vector<16x32xf32>
    %cst_31 = arith.constant dense<0.000000e+00> : vector<16xf32>
    %81 = vector.multi_reduction <add>, %80, %cst_31 [1] : vector<16x32xf32> to vector<16xf32>
    %82 = vector.shape_cast %81 : vector<16xf32> to vector<16x1xf32>
    %cst_32 = arith.constant 3.200000e+01 : f32
    %83 = vector.broadcast %cst_32 : f32 to vector<16x1xf32>
    %84 = arith.divf %82, %83 : vector<16x1xf32>
    %85 = vector.broadcast %77 : vector<16x1xf32> to vector<16x32xf32>
    %86 = arith.subf %73, %85 : vector<16x32xf32>
    %cst_33 = arith.constant 9.99999974E-6 : f32
    %87 = vector.broadcast %cst_33 : f32 to vector<16x1xf32>
    %88 = arith.addf %84, %87 : vector<16x1xf32>
    %89 = math.rsqrt %88 : vector<16x1xf32>
    %90 = vector.broadcast %89 : vector<16x1xf32> to vector<16x32xf32>
    %91 = arith.mulf %86, %90 : vector<16x32xf32>
    %92 = vector.broadcast %5 : vector<1x32xf32> to vector<16x32xf32>
    %93 = arith.mulf %91, %92 : vector<16x32xf32>
    %94 = vector.broadcast %6 : vector<1x32xf32> to vector<16x32xf32>
    %95 = arith.addf %93, %94 : vector<16x32xf32>
    %c16 = arith.constant 16 : index
    %c0_34 = arith.constant 0 : index
    %96 = vector.load %arg7[%c16, %c0_34] : memref<32x32xf32, #tpu.memory_space<vmem>>, vector<16x32xf32>
    tpu.vector_store %arg7[%c16, %c0_34], %95 {strides = array<i32>} : memref<32x32xf32, #tpu.memory_space<vmem>>, vector<16x32xf32>,
    return
  }
  func.func @transform_0(%arg0: i32) -> (i32, i32, i32) {
    %c0_i32 = arith.constant 0 : i32
    %c0_i32_0 = arith.constant 0 : i32
    %c0_i32_1 = arith.constant 0 : i32
    return %arg0, %c0_i32, %c0_i32_0 : i32, i32, i32
  }
  func.func @transform_1(%arg0: i32) -> (i32, i32) {
    %c0_i32 = arith.constant 0 : i32
    %c0_i32_0 = arith.constant 0 : i32
    return %arg0, %c0_i32 : i32, i32
  }
  func.func @transform_2(%arg0: i32) -> (i32, i32) {
    %c0_i32 = arith.constant 0 : i32
    %c0_i32_0 = arith.constant 0 : i32
    %c0_i32_1 = arith.constant 0 : i32
    return %c0_i32, %c0_i32_0 : i32, i32
  }
  func.func @transform_3(%arg0: i32) -> (i32, i32) {
    %c0_i32 = arith.constant 0 : i32
    %c0_i32_0 = arith.constant 0 : i32
    %c0_i32_1 = arith.constant 0 : i32
    return %c0_i32, %c0_i32_0 : i32, i32
  }
  func.func @transform_4(%arg0: i32) -> (i32, i32) {
    %c0_i32 = arith.constant 0 : i32
    %c0_i32_0 = arith.constant 0 : i32
    %c0_i32_1 = arith.constant 0 : i32
    return %c0_i32, %c0_i32_0 : i32, i32
  }
  func.func @transform_5(%arg0: i32) -> (i32, i32) {
    %c0_i32 = arith.constant 0 : i32
    %c0_i32_0 = arith.constant 0 : i32
    %c0_i32_1 = arith.constant 0 : i32
    return %c0_i32, %c0_i32_0 : i32, i32
  }
  func.func @transform_6(%arg0: i32) -> (i32, i32) {
    %c0_i32 = arith.constant 0 : i32
    %c0_i32_0 = arith.constant 0 : i32
    return %arg0, %c0_i32 : i32, i32
  }
}

</mosaic_0001>

<llo_original>
// kernel: tpu_custom_call.1
$region0: #{tpu_custom_call.1}
  #allocation0 [shape = 'u32[]', space=smem, size = 0x4, offset = 0x4, fixed_abs, tag = 'smem constant byte address 0x4 - core index']
  #allocation1 [shape = 'u32[72,128]{1,0:T(1,128)}', space=vmem, size = 0x9000, scoped, tag = 'internal scratch']
  %s0 = inlined_call_operand.hbm [shape: bf16[2,16,16], index: 0, kind: input, shape index: {}]
  %s1 = inlined_call_operand.hbm [shape: f32[32,32], index: 1, kind: input, shape index: {}]
  %s2 = inlined_call_operand.hbm [shape: bf16[32,32], index: 2, kind: input, shape index: {}]
  %s3 = inlined_call_operand.vmem [shape: f32[1,32], index: 3, kind: input, shape index: {}]
  %s4 = inlined_call_operand.vmem [shape: f32[1,32], index: 4, kind: input, shape index: {}]
  %s5 = inlined_call_operand.vmem [shape: f32[1,32], index: 5, kind: input, shape index: {}]
  %s6 = inlined_call_operand.hbm [shape: f32[32,32], index: 6, kind: output, shape index: {}]
  %s7 = sld [smem:[#allocation0]]
  $region46: #{tpu_custom_call.1} parent=0
    _
  %s9 = ssub.s32 1, %s7
  %s10 = scalar_select 0, %s9, %s7
  $region1: #{tpu_custom_call.1} parent=0
    #allocation2 [shape = 'u8[8192]{0}', space=vmem, size = 0x2000, scoped, tag = 'input window, operand 0, single buffered']
    #allocation3 [shape = 's32[1]{0}', space=sflag, size = 0x4, scoped, tag = 'scoped memory for tpu_custom_call.1']
    #allocation4 [shape = 's32[1]{0}', space=sflag, size = 0x4, scoped, tag = 'scoped memory for tpu_custom_call.1']
    #allocation5 [shape = 'u8[16384]{0}', space=vmem, size = 0x4000, scoped, tag = 'input window, operand 1, single buffered']
    #allocation6 [shape = 's32[1]{0}', space=sflag, size = 0x4, scoped, tag = 'scoped memory for tpu_custom_call.1']
    #allocation7 [shape = 'u8[8192]{0}', space=vmem, size = 0x2000, scoped, tag = 'input window, operand 2, single buffered']
    #allocation8 [shape = 'u8[16384]{0}', space=vmem, size = 0x4000, scoped, tag = 'output window, operand 0, single buffered']
    %11 = vsyncpa [#allocation3], 0
    %12 = vsyncpa [#allocation6], 0
    %13 = vsyncpa [#allocation4], 0
    // Predicated region
    $region2: #{tpu_custom_call.1} parent=1 // pred_check
      _
    $region3: #{tpu_custom_call.1} parent=1 // pred_check_branch
      %15 = sbr.rel (0) target = $region5
    $region4: #{tpu_custom_call.1} parent=1 // pred_region
      %17 = vsyncadd [#allocation3], 0
      %s18 = sshll.u32 %s0, 4
      %s19 = int_to_ptr.hbm [resolvable:$true] %s18
      %s20 = sshll.u32 [#allocation2], 4
      %s21 = int_to_ptr.vmem [resolvable:$true] %s20
      %26 = dma.hbm_to_vmem [thread:$0]  %s19, 256, %s21, [#allocation3], 64, 64, 4
    $region5: #{tpu_custom_call.1} parent=1 // pred_fallthru
      _
    // Predicated region
    $region6: #{tpu_custom_call.1} parent=1 // pred_check
      _
    $region7: #{tpu_custom_call.1} parent=1 // pred_check_branch
      %28 = sbr.rel (0) target = $region9
    $region8: #{tpu_custom_call.1} parent=1 // pred_region
      %30 = vsyncadd [#allocation6], 0
      %s31 = sshll.u32 %s1, 4
      %s32 = int_to_ptr.hbm [resolvable:$true] %s31
      %s33 = sshll.u32 [#allocation5], 4
      %s34 = int_to_ptr.vmem [resolvable:$true] %s33
      %39 = dma.hbm_to_vmem [thread:$0]  %s32, 512, %s34, [#allocation6], 128, 128, 8
    $region9: #{tpu_custom_call.1} parent=1 // pred_fallthru
      _
    // Predicated region
    $region10: #{tpu_custom_call.1} parent=1 // pred_check
      _
    $region11: #{tpu_custom_call.1} parent=1 // pred_check_branch
      %41 = sbr.rel (0) target = $region13
    $region12: #{tpu_custom_call.1} parent=1 // pred_region
      %43 = vsyncadd [#allocation6], 0
      %s44 = sshll.u32 %s2, 4
      %s45 = int_to_ptr.hbm [resolvable:$true] %s44
      %s46 = sshll.u32 [#allocation7], 4
      %s47 = int_to_ptr.vmem [resolvable:$true] %s46
      %52 = dma.hbm_to_vmem [thread:$0]  %s45, 256, %s47, [#allocation6], 64, 64, 4
    $region13: #{tpu_custom_call.1} parent=1 // pred_fallthru
      _
    // Predicated region
    $region14: #{tpu_custom_call.1} parent=1 // pred_check
      _
    $region15: #{tpu_custom_call.1} parent=1 // pred_check_branch
      %54 = sbr.rel (0) target = $region17
    $region16: #{tpu_custom_call.1} parent=1 // pred_region
      _
    $region17: #{tpu_custom_call.1} parent=1 // pred_fallthru
      _
    // Predicated region
    $region18: #{tpu_custom_call.1} parent=1 // pred_check
      _
    $region19: #{tpu_custom_call.1} parent=1 // pred_check_branch
      %56 = sbr.rel (0) target = $region21
    $region20: #{tpu_custom_call.1} parent=1 // pred_region
      _
    $region21: #{tpu_custom_call.1} parent=1 // pred_fallthru
      _
    // Predicated region
    $region22: #{tpu_custom_call.1} parent=1 // pred_check
      _
    $region23: #{tpu_custom_call.1} parent=1 // pred_check_branch
      %58 = sbr.rel (0) target = $region25
    $region24: #{tpu_custom_call.1} parent=1 // pred_region
      _
    $region25: #{tpu_custom_call.1} parent=1 // pred_fallthru
      _
    // Predicated region
    $region26: #{tpu_custom_call.1} parent=1 // pred_check
      _
    $region27: #{tpu_custom_call.1} parent=1 // pred_check_branch
      %60 = sbr.rel (0) target = $region29
    $region28: #{tpu_custom_call.1} parent=1 // pred_region
      %62 = dma.done [#allocation3], 256
    $region29: #{tpu_custom_call.1} parent=1 // pred_fallthru
      _
    // Predicated region
    $region30: #{tpu_custom_call.1} parent=1 // pred_check
      _
    $region31: #{tpu_custom_call.1} parent=1 // pred_check_branch
      %64 = sbr.rel (0) target = $region33
    $region32: #{tpu_custom_call.1} parent=1 // pred_region
      %66 = dma.done [#allocation6], 512
    $region33: #{tpu_custom_call.1} parent=1 // pred_fallthru
      _
    // Predicated region
    $region34: #{tpu_custom_call.1} parent=1 // pred_check
      _
    $region35: #{tpu_custom_call.1} parent=1 // pred_check_branch
      %68 = sbr.rel (0) target = $region37
    $region36: #{tpu_custom_call.1} parent=1 // pred_region
      %70 = dma.done [#allocation6], 256
    $region37: #{tpu_custom_call.1} parent=1 // pred_fallthru
      _
    %v72 = vld [vmem:[#allocation5] sm:$0xff]
    %v73 = vld [vmem:[#allocation5 + $0x8] sm:$0xff]
    %v74 = vld [vmem:[#allocation5 + $0x10] sm:$0xff]
    %v75 = vld [vmem:[#allocation5 + $0x18] sm:$0xff]
    %v76 = vpack.c.bf16 %v73, %v72
    %v77 = vpack.c.bf16 %v75, %v74
    %v78 = vld [vmem:[#allocation7] sm:$0xf]
    %v79 = vld [vmem:[#allocation7 + $0x4] sm:$0xf]
    %v80 = vld [vmem:[#allocation7 + $0x8] sm:$0xf]
    %v81 = vld [vmem:[#allocation7 + $0xc] sm:$0xf]
    %v86 = vunpack.c.l.b16 %v78
    %v87 = vunpack.c.l.b16 %v79
    %v88 = vunpack.c.l.b16 %v80
    %v89 = vunpack.c.l.b16 %v81
    %v90 = vpack.c.b16 %v87, %v86
    %v91 = vpack.c.b16 %v89, %v88
    %vm94 = vcmask 261120
    %v96 = vsel %vm94, %v76, 0
    %v99 = vsel %vm94, %v77, 0
    %101 = vmatpush.bf16.msra.mxu0 0
    %102 = vmatpush.bf16.msra.mxu0 0
    %103 = vmatpush.bf16.msra.mxu0 0
    %104 = vmatpush.bf16.msra.mxu0 0
    %105 = vmatpush.bf16.msra.mxu0 0
    %106 = vmatpush.bf16.msra.mxu0 0
    %107 = vmatpush.bf16.msra.mxu0 %v91
    %108 = vmatpush.bf16.msra.mxu0 %v90
    %109 = vmatmul.bf16.gmra.mxu0 %v96
    %v110 = vpop.f32.mrf.mxu0
    %v111 = vadd.f32 0.0, %v110
    %v112 = vpop.f32.mrf.mxu0
    %v113 = vadd.f32 0.0, %v112
    %114 = vmatmul.bf16.gmra.mxu0 %v99
    %v115 = vpop.f32.mrf.mxu0
    %v116 = vadd.f32 0.0, %v115
    %v117 = vpop.f32.mrf.mxu0
    %v118 = vadd.f32 0.0, %v117
    %119 = vdwg.mxu0
    %v120 = vld [vmem:[%s3] sm:$0x1]
    %v121 = vld [vmem:[%s4] sm:$0x1]
    %v122 = vld [vmem:[%s5] sm:$0x1]
    %v123 = vld [vmem:[#allocation2] sm:$0xf]
    %v124 = vld [vmem:[#allocation2 + $0x4] sm:$0xf]
    %v125 = vunpack.c.l.bf16 %v123
    %v126 = vunpack.c.l.bf16 %v124
    %vm127 = vcmask 130048
    %v128 = vsel %vm127, %v125, 0.0
    %129 = vadd.xlane.f32.xlu0 %v128
    %v130 = vpop.xlane.xlu0 %129
    %v131 = vsel %vm127, %v126, 0.0
    %132 = vadd.xlane.f32.xlu0 %v131
    %v133 = vpop.xlane.xlu0 %132
    %v134 = vadd.f32 %v130, 1.0
    %v135 = vadd.f32 %v133, 1.0
    %v136 = vrsqrt.pop %v134
    %v137 = vmul.f32 %v136, %v134
    %v138 = vmul.f32 %v137, %v136
    %v139 = vmul.f32 0.5, %v138
    %v140 = vsub.f32 1.5, %v139
    %v141 = vmul.f32 %v136, %v140
    %vm142 = vweird.f32 %v134
    %vm143 = vweird.f32 %v136
    %vm144 = vmor %vm142, %vm143
    %v145 = vsel %vm144, %v136, %v141
    %v146 = vrsqrt.pop %v135
    %v147 = vmul.f32 %v146, %v135
    %v148 = vmul.f32 %v147, %v146
    %v149 = vmul.f32 0.5, %v148
    %v150 = vsub.f32 1.5, %v149
    %v151 = vmul.f32 %v146, %v150
    %vm152 = vweird.f32 %v135
    %vm153 = vweird.f32 %v146
    %vm154 = vmor %vm152, %vm153
    %v155 = vsel %vm154, %v146, %v151
    %v156 = vmul.f32 %v145, %v111
    %v157 = vmul.f32 %v155, %v113
    %v158 = vpack.c.bf16 %v157, %v156
    %v161 = vunpack.c.l.b16 %v123
    %v162 = vunpack.c.l.b16 %v124
    %v163 = vpack.c.b16 %v162, %v161
    %v165 = vsel %vm127, %v163, 0
    %167 = vmatpush.bf16.msra.mxu0 0
    %168 = vmatpush.bf16.msra.mxu0 0
    %169 = vmatpush.bf16.msra.mxu0 0
    %170 = vmatpush.bf16.msra.mxu0 0
    %171 = vmatpush.bf16.msra.mxu0 0
    %172 = vmatpush.bf16.msra.mxu0 0
    %173 = vmatpush.bf16.msra.mxu0 0
    %174 = vmatpush.bf16.msra.mxu0 %v158
    %175 = vmatmul.bf16.gmra.mxu0 %v165
    %v176 = vpop.f32.mrf.mxu0
    %v177 = vadd.f32 %v156, %v176
    %v178 = vpop.f32.mrf.mxu0
    %v179 = vadd.f32 %v157, %v178
    %180 = vdwg.mxu0
    %v181 = vmul.f32 %v145, %v177
    %v182 = vmul.f32 %v155, %v179
    %v184 = vperm.slane %v120, 0
    %v186 = vadd.f32 %v181, %v184
    %v187 = vadd.f32 %v182, %v184
    %v188 = vmax.f32 %v186, 0.0
    %v189 = vmax.f32 %v187, 0.0
    %v190 = vadd.f32 %v188, %v72
    %v191 = vadd.f32 %v189, %v73
    %v192 = vsel %vm94, %v190, 0.0
    %193 = vadd.xlane.f32.xlu0 %v192
    %v194 = vpop.xlane.xlu0 %193
    %v195 = vsel %vm94, %v191, 0.0
    %196 = vadd.xlane.f32.xlu0 %v195
    %v197 = vpop.xlane.xlu0 %196
    %v198 = vrcp.pop 32.0
    %v199 = vmul.f32 32.0, %v198
    %v200 = vsub.f32 1.0, %v199
    %v201 = vmul.f32 %v198, %v200
    %v202 = vadd.f32 %v198, %v201
    %vm203 = vweird.f32 %v198
    %v204 = vsel %vm203, %v198, %v202
    %v205 = vmul.f32 %v194, %v204
    %v206 = vmul.f32 %v197, %v204
    %v207 = vsub.f32 %v190, %v205
    %v208 = vsub.f32 %v191, %v206
    %v209 = vmul.f32 %v207, %v207
    %v210 = vmul.f32 %v208, %v208
    %v211 = vsel %vm94, %v209, 0.0
    %212 = vadd.xlane.f32.xlu0 %v211
    %v213 = vpop.xlane.xlu0 %212
    %v214 = vsel %vm94, %v210, 0.0
    %215 = vadd.xlane.f32.xlu0 %v214
    %v216 = vpop.xlane.xlu0 %215
    %v217 = vmul.f32 %v213, %v204
    %v218 = vmul.f32 %v216, %v204
    %v219 = vadd.f32 %v217, 1e-05
    %v220 = vadd.f32 %v218, 1e-05
    %v221 = vrsqrt.pop %v219
    %v222 = vmul.f32 %v221, %v219
    %v223 = vmul.f32 %v222, %v221
    %v224 = vmul.f32 0.5, %v223
    %v225 = vsub.f32 1.5, %v224
    %v226 = vmul.f32 %v221, %v225
    %vm227 = vweird.f32 %v219
    %vm228 = vweird.f32 %v221
    %vm229 = vmor %vm227, %vm228
    %v230 = vsel %vm229, %v221, %v226
    %v231 = vrsqrt.pop %v220
    %v232 = vmul.f32 %v231, %v220
    %v233 = vmul.f32 %v232, %v231
    %v234 = vmul.f32 0.5, %v233
    %v235 = vsub.f32 1.5, %v234
    %v236 = vmul.f32 %v231, %v235
    %vm237 = vweird.f32 %v220
    %vm238 = vweird.f32 %v231
    %vm239 = vmor %vm237, %vm238
    %v240 = vsel %vm239, %v231, %v236
    %v241 = vmul.f32 %v207, %v230
    %v242 = vmul.f32 %v208, %v240
    %v244 = vperm.slane %v121, 0
    %v246 = vmul.f32 %v241, %v244
    %v247 = vmul.f32 %v242, %v244
    %v249 = vperm.slane %v122, 0
    %v251 = vadd.f32 %v246, %v249
    %v252 = vadd.f32 %v247, %v249
    %253 = vst.msk [vmem:[#allocation8] sm:$0xff] %vm94, %v251
    %254 = vst.msk [vmem:[#allocation8 + $0x8] sm:$0xff] %vm94, %v252
    %s255 = scalar_lea.vmem [#allocation2], 8
    %v256 = vld [vmem:[%s255] sm:$0xf]
    %v257 = vld [vmem:[%s255 + $0x4] sm:$0xf]
    %v258 = vunpack.c.l.bf16 %v256
    %v259 = vunpack.c.l.bf16 %v257
    %v260 = vsel %vm127, %v258, 0.0
    %261 = vadd.xlane.f32.xlu0 %v260
    %v262 = vpop.xlane.xlu0 %261
    %v263 = vsel %vm127, %v259, 0.0
    %264 = vadd.xlane.f32.xlu0 %v263
    %v265 = vpop.xlane.xlu0 %264
    %v266 = vadd.f32 %v262, 1.0
    %v267 = vadd.f32 %v265, 1.0
    %v268 = vrsqrt.pop %v266
    %v269 = vmul.f32 %v268, %v266
    %v270 = vmul.f32 %v269, %v268
    %v271 = vmul.f32 0.5, %v270
    %v272 = vsub.f32 1.5, %v271
    %v273 = vmul.f32 %v268, %v272
    %vm274 = vweird.f32 %v266
    %vm275 = vweird.f32 %v268
    %vm276 = vmor %vm274, %vm275
    %v277 = vsel %vm276, %v268, %v273
    %v278 = vrsqrt.pop %v267
    %v279 = vmul.f32 %v278, %v267
    %v280 = vmul.f32 %v279, %v278
    %v281 = vmul.f32 0.5, %v280
    %v282 = vsub.f32 1.5, %v281
    %v283 = vmul.f32 %v278, %v282
    %vm284 = vweird.f32 %v267
    %vm285 = vweird.f32 %v278
    %vm286 = vmor %vm284, %vm285
    %v287 = vsel %vm286, %v278, %v283
    %v288 = vmul.f32 %v277, %v116
    %v289 = vmul.f32 %v287, %v118
    %v290 = vpack.c.bf16 %v289, %v288
    %v293 = vunpack.c.l.b16 %v256
    %v294 = vunpack.c.l.b16 %v257
    %v295 = vpack.c.b16 %v294, %v293
    %v297 = vsel %vm127, %v295, 0
    %299 = vmatpush.bf16.msra.mxu0 0
    %300 = vmatpush.bf16.msra.mxu0 0
    %301 = vmatpush.bf16.msra.mxu0 0
    %302 = vmatpush.bf16.msra.mxu0 0
    %303 = vmatpush.bf16.msra.mxu0 0
    %304 = vmatpush.bf16.msra.mxu0 0
    %305 = vmatpush.bf16.msra.mxu0 0
    %306 = vmatpush.bf16.msra.mxu0 %v290
    %307 = vmatmul.bf16.gmra.mxu0 %v297
    %v308 = vpop.f32.mrf.mxu0
    %v309 = vadd.f32 %v288, %v308
    %v310 = vpop.f32.mrf.mxu0
    %v311 = vadd.f32 %v289, %v310
    %312 = vdwg.mxu0
    %v313 = vmul.f32 %v277, %v309
    %v314 = vmul.f32 %v287, %v311
    %v315 = vadd.f32 %v313, %v184
    %v316 = vadd.f32 %v314, %v184
    %v317 = vmax.f32 %v315, 0.0
    %v318 = vmax.f32 %v316, 0.0
    %v319 = vadd.f32 %v317, %v74
    %v320 = vadd.f32 %v318, %v75
    %v321 = vsel %vm94, %v319, 0.0
    %322 = vadd.xlane.f32.xlu0 %v321
    %v323 = vpop.xlane.xlu0 %322
    %v324 = vsel %vm94, %v320, 0.0
    %325 = vadd.xlane.f32.xlu0 %v324
    %v326 = vpop.xlane.xlu0 %325
    %v327 = vmul.f32 %v323, %v204
    %v328 = vmul.f32 %v326, %v204
    %v329 = vsub.f32 %v319, %v327
    %v330 = vsub.f32 %v320, %v328
    %v331 = vmul.f32 %v329, %v329
    %v332 = vmul.f32 %v330, %v330
    %v333 = vsel %vm94, %v331, 0.0
    %334 = vadd.xlane.f32.xlu0 %v333
    %v335 = vpop.xlane.xlu0 %334
    %v336 = vsel %vm94, %v332, 0.0
    %337 = vadd.xlane.f32.xlu0 %v336
    %v338 = vpop.xlane.xlu0 %337
    %v339 = vmul.f32 %v335, %v204
    %v340 = vmul.f32 %v338, %v204
    %v341 = vadd.f32 %v339, 1e-05
    %v342 = vadd.f32 %v340, 1e-05
    %v343 = vrsqrt.pop %v341
    %v344 = vmul.f32 %v343, %v341
    %v345 = vmul.f32 %v344, %v343
    %v346 = vmul.f32 0.5, %v345
    %v347 = vsub.f32 1.5, %v346
    %v348 = vmul.f32 %v343, %v347
    %vm349 = vweird.f32 %v341
    %vm350 = vweird.f32 %v343
    %vm351 = vmor %vm349, %vm350
    %v352 = vsel %vm351, %v343, %v348
    %v353 = vrsqrt.pop %v342
    %v354 = vmul.f32 %v353, %v342
    %v355 = vmul.f32 %v354, %v353
    %v356 = vmul.f32 0.5, %v355
    %v357 = vsub.f32 1.5, %v356
    %v358 = vmul.f32 %v353, %v357
    %vm359 = vweird.f32 %v342
    %vm360 = vweird.f32 %v353
    %vm361 = vmor %vm359, %vm360
    %v362 = vsel %vm361, %v353, %v358
    %v363 = vmul.f32 %v329, %v352
    %v364 = vmul.f32 %v330, %v362
    %v365 = vmul.f32 %v363, %v244
    %v366 = vmul.f32 %v364, %v244
    %v367 = vadd.f32 %v365, %v249
    %v368 = vadd.f32 %v366, %v249
    %369 = vst.msk [vmem:[#allocation8 + $0x10] sm:$0xff] %vm94, %v367
    %370 = vst.msk [vmem:[#allocation8 + $0x18] sm:$0xff] %vm94, %v368
    // Predicated region
    $region38: #{tpu_custom_call.1} parent=1 // pred_check
      _
    $region39: #{tpu_custom_call.1} parent=1 // pred_check_branch
      %372 = sbr.rel (0) target = $region41
    $region40: #{tpu_custom_call.1} parent=1 // pred_region
      %374 = vsyncadd [#allocation4], 0
      %s375 = sshll.u32 [#allocation8], 4
      %s376 = int_to_ptr.vmem [resolvable:$true] %s375
      %s377 = sshll.u32 %s6, 4
      %s378 = int_to_ptr.hbm [resolvable:$true] %s377
      %383 = dma.vmem_to_hbm [thread:$0]  %s376, 512, %s378, [#allocation4], 128, 128, 8
    $region41: #{tpu_custom_call.1} parent=1 // pred_fallthru
      _
    // Predicated region
    $region42: #{tpu_custom_call.1} parent=1 // pred_check
      _
    $region43: #{tpu_custom_call.1} parent=1 // pred_check_branch
      %385 = sbr.rel (0) target = $region45
    $region44: #{tpu_custom_call.1} parent=1 // pred_region
      %387 = dma.done [#allocation4], 512
    $region45: #{tpu_custom_call.1} parent=1 // pred_fallthru
      _
    %388 = vsyncpa [#allocation3], 1
    %389 = vsyncpa [#allocation6], 1
    %390 = vsyncpa [#allocation4], 1

</llo_original>
